<compile_context>
chip_gen: v7x
topology: tpu7x:2x2x1
jax: 0.10.0
libtpu: 0.0.40
codegen_flags: <defaults>
</compile_context>

<pallas_src>
import functools

import jax
import jax.numpy as jnp
from jax.experimental import pallas as pl
from jax.experimental.pallas import tpu as pltpu


def _cdiv(a, b):
    return -(-a // b)


def _round_up(x, m):
    return _cdiv(x, m) * m


def _vmem_budget_bytes():
    """Per-chip usable VMEM budget (leave headroom for Mosaic internals)."""
    try:
        info = pltpu.get_tpu_info()
        cap = int(getattr(info, "vmem_capacity_bytes", 64 << 20))
    except Exception:  # conservative fallback if the query is unavailable
        cap = 64 << 20
    cap = max(cap, 32 << 20)
    # v5e/v6e: 128 MiB physical -> use ~100 MiB; v7x: 64 MiB -> ~52 MiB.
    return max(min(cap - (12 << 20), 100 << 20), 24 << 20)


def _choose_tile_b(B):
    """Batch tile: minimal padding, MXU-friendly alignment, >=2 tiles if possible."""
    if B <= 16:
        return _round_up(B, 8)
    n_tiles = max(2, _cdiv(B, 512))          # >=2 parallel tiles for v7x's 2 TCs
    raw = _cdiv(B, n_tiles)
    best = None
    for align in (256, 128, 8):              # prefer MXU-height alignment on ties
        t = _round_up(raw, align)
        padded = _round_up(B, t)
        if best is None or padded < best[0]:
            best = (padded, t)
    return best[1]


def _vmem_need_bytes(tb, d_in, th, d_out_p, x_sz, w_sz, out_sz,
                     cast_in_kernel, use_scratch):
    need = 2 * tb * d_in * x_sz                      # x tiles (double-buffered)
    need += 2 * (d_in + d_out_p) * th * w_sz         # W1 / W2 blocks
    need += 2 * (th + d_out_p) * 4                   # bias blocks
    need += 2 * tb * d_out_p * out_sz                # y tiles
    if use_scratch:
        need += tb * d_out_p * 4                     # f32 accumulator
    need += tb * th * 4                              # h1 intermediate (f32)
    if cast_in_kernel:
        need += tb * (d_in + th) * 2                 # bf16 copies of x / h1
    return need


def _plan_tiles(B, d_in, h1, d_out_p, x_sz, w_sz, out_sz, cast_in_kernel, budget):
    tb0 = _choose_tile_b(B)
    tb_candidates = [tb0] + [t for t in (512, 256, 128, 64, 32, 16, 8) if t < tb0]
    for tb in tb_candidates:
        # Preferred: whole weight matrices VMEM-resident -> single reduction
        # step, weights DMA'd once for the entire grid.
        if _vmem_need_bytes(tb, d_in, h1, d_out_p, x_sz, w_sz, out_sz,
                            cast_in_kernel, False) <= budget:
            return tb, h1
        # Fallback: stream H1 chunks (re-fetched once per batch tile).
        for th in (2048, 1024, 512, 256, 128):
            if th < h1 and _vmem_need_bytes(tb, d_in, th, d_out_p, x_sz, w_sz,
                                            out_sz, cast_in_kernel,
                                            out_sz != 4) <= budget:
                return tb, th
    return 8, min(h1, 128)   # extreme shapes: smallest tiles we support


# ---------------------------- kernels ----------------------------------------


def _fused_kernel(compute_dtype, x_ref, w1_ref, b1_ref, w2_ref, b2_ref, y_ref):
    """Whole forward pass in one grid step (weights VMEM-resident)."""
    xv = x_ref[...].astype(compute_dtype)      # VPU cast, hidden under MXU work
    h1 = jnp.dot(xv, w1_ref[...], preferred_element_type=jnp.float32)
    h1 = jnp.maximum(h1 + b1_ref[...], 0.0)    # f32 bias-add + ReLU
    y = jnp.dot(h1.astype(w2_ref.dtype), w2_ref[...],
                preferred_element_type=jnp.float32)
    y_ref[...] = (y + b2_ref[...]).astype(y_ref.dtype)


def _chunked_kernel_inplace(compute_dtype, x_ref, w1_ref, b1_ref, w2_ref, b2_ref,
                            y_ref):
    """H1-chunked path, f32 output: accumulate directly into the resident y block."""
    k = pl.program_id(1)

    @pl.when(k == 0)
    def _():
        y_ref[...] = jnp.broadcast_to(b2_ref[...], y_ref.shape)

    xv = x_ref[...].astype(compute_dtype)
    h1 = jnp.dot(xv, w1_ref[...], preferred_element_type=jnp.float32)
    h1 = jnp.maximum(h1 + b1_ref[...], 0.0)
    y_ref[...] += jnp.dot(h1.astype(w2_ref.dtype), w2_ref[...],
                          preferred_element_type=jnp.float32)


def _chunked_kernel_scratch(compute_dtype, x_ref, w1_ref, b1_ref, w2_ref, b2_ref,
                            y_ref, acc_ref):
    """H1-chunked path, non-f32 output: accumulate in an f32 scratch."""
    k = pl.program_id(1)

    @pl.when(k == 0)
    def _():
        acc_ref[...] = jnp.broadcast_to(b2_ref[...], acc_ref.shape)

    xv = x_ref[...].astype(compute_dtype)
    h1 = jnp.dot(xv, w1_ref[...], preferred_element_type=jnp.float32)
    h1 = jnp.maximum(h1 + b1_ref[...], 0.0)
    acc_ref[...] += jnp.dot(h1.astype(w2_ref.dtype), w2_ref[...],
                            preferred_element_type=jnp.float32)

    @pl.when(k == pl.num_programs(1) - 1)
    def _():
        y_ref[...] = acc_ref[...].astype(y_ref.dtype)


# ---------------------------- wrapper -----------------------------------------


def two_layer_net(x, w1, b1, w2, b2, *, compute_dtype=jnp.bfloat16,
                  tile_b=None, tile_h=None):
    """relu(x @ w1.T + b1) @ w2.T + b2   (PyTorch nn.Linear weight layout).

    x: [B, D_in]; w1: [H1, D_in]; b1: [H1]; w2: [D_out, H1]; b2: [D_out].
    `compute_dtype` is the MXU operand dtype (bf16 default, f32 accumulation).
    """
    B, D_in = x.shape
    H1, D_out = w1.shape[0], w2.shape[0]
    out_dtype = x.dtype

    # One-time parameter prep (in production: store params pre-transposed/cast).
    w1_t = jnp.asarray(w1, compute_dtype).T            # [D_in, H1]
    w2_t = jnp.asarray(w2, compute_dtype).T            # [H1, D_out]
    b1_2d = jnp.asarray(b1, jnp.float32).reshape(1, H1)
    b2_2d = jnp.asarray(b2, jnp.float32).reshape(1, D_out)

    # Lane-dense output: pad D_out up to a multiple of 128 (sliced off below).
    D_out_p = _round_up(D_out, 128)
    if D_out_p != D_out:
        w2_t = jnp.pad(w2_t, ((0, 0), (0, D_out_p - D_out)))
        b2_2d = jnp.pad(b2_2d, ((0, 0), (0, D_out_p - D_out)))

    x_sz = jnp.dtype(x.dtype).itemsize
    w_sz = jnp.dtype(compute_dtype).itemsize
    out_sz = jnp.dtype(out_dtype).itemsize
    cast_in_kernel = jnp.dtype(compute_dtype) != jnp.dtype(x.dtype)
    budget = _vmem_budget_bytes()

    # Tiling plan derived from the per-chip VMEM budget.
    auto_tb, auto_th = _plan_tiles(B, D_in, H1, D_out_p, x_sz, w_sz, out_sz,
                                   cast_in_kernel, budget)
    tile_b = auto_tb if tile_b is None else max(8, int(tile_b))
    tile_h = auto_th if tile_h is None else int(tile_h)
    assert tile_h == H1 or tile_h % 128 == 0, "chunked tile_h must be lane-aligned"

    B_pad = _round_up(B, tile_b)
    if B_pad != B:
        x = jnp.pad(x, ((0, B_pad - B), (0, 0)))        # zero rows, sliced off

    H1_pad = H1 if tile_h == H1 else _round_up(H1, tile_h)
    if H1_pad != H1:                                    # zero pad: contributes 0
        w1_t = jnp.pad(w1_t, ((0, 0), (0, H1_pad - H1)))
        b1_2d = jnp.pad(b1_2d, ((0, 0), (0, H1_pad - H1)))
        w2_t = jnp.pad(w2_t, ((0, H1_pad - H1), (0, 0)))

    nb = B_pad // tile_b
    nk = H1_pad // tile_h

    w_bytes = (D_in + D_out_p) * H1_pad * w_sz
    weight_passes = 1 if nk == 1 else nb                # resident vs re-streamed
    cost = pl.CostEstimate(
        flops=2 * B_pad * (D_in * H1_pad + H1_pad * D_out_p),
        transcendentals=0,
        bytes_accessed=(B_pad * D_in * x_sz + weight_passes * w_bytes
                        + (H1_pad + D_out_p) * 4 + B_pad * D_out_p * out_sz),
    )
    compiler_params = pltpu.CompilerParams(
        dimension_semantics=("parallel",) if nk == 1 else ("parallel", "arbitrary"),
        vmem_limit_bytes=int(budget),
    )

    if nk == 1:
        kernel = functools.partial(_fused_kernel, compute_dtype)
        grid = (nb,)
        in_specs = [
            pl.BlockSpec((tile_b, D_in), lambda i: (i, 0)),       # x tile
            pl.BlockSpec((D_in, H1_pad), lambda i: (0, 0)),       # W1 (resident)
            pl.BlockSpec((1, H1_pad), lambda i: (0, 0)),          # b1 (resident)
            pl.BlockSpec((H1_pad, D_out_p), lambda i: (0, 0)),    # W2 (resident)
            pl.BlockSpec((1, D_out_p), lambda i: (0, 0)),         # b2 (resident)
        ]
        out_specs = pl.BlockSpec((tile_b, D_out_p), lambda i: (i, 0))
        scratch_shapes = []
    else:
        acc_inplace = jnp.dtype(out_dtype) == jnp.dtype(jnp.float32)
        kernel = functools.partial(
            _chunked_kernel_inplace if acc_inplace else _chunked_kernel_scratch,
            compute_dtype)
        grid = (nb, nk)                                   # reduction axis last
        in_specs = [
            pl.BlockSpec((tile_b, D_in), lambda i, k: (i, 0)),    # x tile
            pl.BlockSpec((D_in, tile_h), lambda i, k: (0, k)),    # W1 chunk
            pl.BlockSpec((1, tile_h), lambda i, k: (0, k)),       # b1 chunk
            pl.BlockSpec((tile_h, D_out_p), lambda i, k: (k, 0)), # W2 chunk
            pl.BlockSpec((1, D_out_p), lambda i, k: (0, 0)),      # b2
        ]
        out_specs = pl.BlockSpec((tile_b, D_out_p), lambda i, k: (i, 0))
        scratch_shapes = ([] if acc_inplace
                          else [pltpu.VMEM((tile_b, D_out_p), jnp.float32)])

    y = pl.pallas_call(
        kernel,
        out_shape=jax.ShapeDtypeStruct((B_pad, D_out_p), out_dtype),
        grid_spec=pltpu.PrefetchScalarGridSpec(
            num_scalar_prefetch=0,
            grid=grid,
            in_specs=in_specs,
            out_specs=out_specs,
            scratch_shapes=scratch_shapes,
        ),
        compiler_params=compiler_params,
        cost_estimate=cost,
    )(x, w1_t, b1_2d, w2_t, b2_2d)

    return y[:B, :D_out]


def reference(x, w1, b1, w2, b2):
    h1 = jnp.maximum(x @ w1.T + b1, 0.0)
    return h1 @ w2.T + b2


if __name__ == "__main__":
    key = jax.random.PRNGKey(0)

    # ---- Test 1: small demo shapes; exact f32 path + bf16 MXU path ----------
    B, D_in, H1, D_out = 8, 32, 64, 16
    kx, kw1, kb1, kw2, kb2 = jax.random.split(key, 5)
    bound1 = 1.0 / (D_in ** 0.5)
    bound2 = 1.0 / (H1 ** 0.5)
    x = jax.random.normal(kx, (B, D_in), dtype=jnp.float32)
    w1 = jax.random.uniform(kw1, (H1, D_in), jnp.float32, -bound1, bound1)
    b1 = jax.random.uniform(kb1, (H1,), jnp.float32, -bound1, bound1)
    w2 = jax.random.uniform(kw2, (D_out, H1), jnp.float32, -bound2, bound2)
    b2 = jax.random.uniform(kb2, (D_out,), jnp.float32, -bound2, bound2)
    y_ref = reference(x, w1, b1, w2, b2)

    y_f32 = jax.block_until_ready(
        two_layer_net(x, w1, b1, w2, b2, compute_dtype=jnp.float32))
    assert y_f32.shape == (B, D_out)
    assert jnp.allclose(y_f32, y_ref, atol=1e-5, rtol=1e-5)

    y_bf16 = jax.block_until_ready(
        two_layer_net(x, w1, b1, w2, b2, compute_dtype=jnp.bfloat16))
    assert jnp.allclose(y_bf16, y_ref, atol=3e-2, rtol=3e-2)

    # ---- Test 2: ragged batch + forced H1 chunking (multi-step reduction) ---
    B2, H1b = 10, 256
    kx2, kw1b, kb1b, kw2b, kb2b = jax.random.split(jax.random.PRNGKey(1), 5)
    boundb = 1.0 / (H1b ** 0.5)
    x2 = jax.random.normal(kx2, (B2, D_in), dtype=jnp.float32)
    w1b = jax.random.uniform(kw1b, (H1b, D_in), jnp.float32, -bound1, bound1)
    b1b = jax.random.uniform(kb1b, (H1b,), jnp.float32, -bound1, bound1)
    w2b = jax.random.uniform(kw2b, (D_out, H1b), jnp.float32, -boundb, boundb)
    b2b = jax.random.uniform(kb2b, (D_out,), jnp.float32, -boundb, boundb)
    y2_ref = reference(x2, w1b, b1b, w2b, b2b)

    y2 = jax.block_until_ready(
        two_layer_net(x2, w1b, b1b, w2b, b2b, compute_dtype=jnp.float32,
                      tile_b=8, tile_h=128))
    assert y2.shape == (B2, D_out)
    assert jnp.allclose(y2, y2_ref, atol=1e-4, rtol=1e-4)

    # Auto-planned path (weights VMEM-resident) on the same ragged batch.
    y3 = jax.block_until_ready(
        two_layer_net(x2, w1b, b1b, w2b, b2b, compute_dtype=jnp.float32))
    assert jnp.allclose(y3, y2_ref, atol=1e-4, rtol=1e-4)

    print("KERNEL_OK")
</pallas_src>

<mosaic_0001>
module attributes {stable_mosaic.version = 11 : i64} {
  func.func @_fused_kernel(%arg0: i32, %arg1: memref<8x32xf32, #tpu.memory_space<vmem>>, %arg2: memref<32x64xf32, #tpu.memory_space<vmem>>, %arg3: memref<1x64xf32, #tpu.memory_space<vmem>>, %arg4: memref<64x128xf32, #tpu.memory_space<vmem>>, %arg5: memref<1x128xf32, #tpu.memory_space<vmem>>, %arg6: memref<8x128xf32, #tpu.memory_space<vmem>>) attributes {dimension_semantics = [#tpu.dimension_semantics<parallel>], iteration_bounds = array<i64: 1>, scalar_prefetch = 0 : i64, scratch_operands = 0 : i64, tpu.core_type = #tpu.core_type<tc>, window_params = [{transform_indices = @transform_0, window_bounds = array<i64: 8, 32>}, {pipeline_mode = #tpu.pipeline_mode<synchronous>, transform_indices = @transform_1, window_bounds = array<i64: 32, 64>}, {pipeline_mode = #tpu.pipeline_mode<synchronous>, transform_indices = @transform_2, window_bounds = array<i64: 1, 64>}, {pipeline_mode = #tpu.pipeline_mode<synchronous>, transform_indices = @transform_3, window_bounds = array<i64: 64, 128>}, {pipeline_mode = #tpu.pipeline_mode<synchronous>, transform_indices = @transform_4, window_bounds = array<i64: 1, 128>}, {transform_indices = @transform_5, window_bounds = array<i64: 8, 128>}]} {
    %c0 = arith.constant 0 : index
    %c0_0 = arith.constant 0 : index
    %0 = vector.load %arg1[%c0, %c0_0] : memref<8x32xf32, #tpu.memory_space<vmem>>, vector<8x32xf32>
    %c0_1 = arith.constant 0 : index
    %c0_2 = arith.constant 0 : index
    %1 = vector.load %arg2[%c0_1, %c0_2] : memref<32x64xf32, #tpu.memory_space<vmem>>, vector<32x64xf32>
    %cst = arith.constant dense<0.000000e+00> : vector<8x64xf32>
    %2 = tpu.matmul %0, %1, %cst {dimension_numbers = #tpu.dot_dimension_numbers<[1], [0], [0], [1], [0, 0, 1, 1], [], []>} : vector<8x32xf32>, vector<32x64xf32>, vector<8x64xf32> -> vector<8x64xf32>
    %c0_3 = arith.constant 0 : index
    %c0_4 = arith.constant 0 : index
    %3 = vector.load %arg3[%c0_3, %c0_4] : memref<1x64xf32, #tpu.memory_space<vmem>>, vector<1x64xf32>
    %4 = vector.broadcast %3 : vector<1x64xf32> to vector<8x64xf32>
    %5 = arith.addf %2, %4 : vector<8x64xf32>
    %cst_5 = arith.constant 0.000000e+00 : f32
    %6 = vector.broadcast %cst_5 : f32 to vector<8x64xf32>
    %7 = arith.maximumf %5, %6 : vector<8x64xf32>
    %c0_6 = arith.constant 0 : index
    %c0_7 = arith.constant 0 : index
    %8 = vector.load %arg4[%c0_6, %c0_7] : memref<64x128xf32, #tpu.memory_space<vmem>>, vector<64x128xf32>
    %cst_8 = arith.constant dense<0.000000e+00> : vector<8x128xf32>
    %9 = tpu.matmul %7, %8, %cst_8 {dimension_numbers = #tpu.dot_dimension_numbers<[1], [0], [0], [1], [0, 0, 1, 1], [], []>} : vector<8x64xf32>, vector<64x128xf32>, vector<8x128xf32> -> vector<8x128xf32>
    %c0_9 = arith.constant 0 : index
    %c0_10 = arith.constant 0 : index
    %10 = vector.load %arg5[%c0_9, %c0_10] : memref<1x128xf32, #tpu.memory_space<vmem>>, vector<1x128xf32>
    %11 = vector.broadcast %10 : vector<1x128xf32> to vector<8x128xf32>
    %12 = arith.addf %9, %11 : vector<8x128xf32>
    %c0_11 = arith.constant 0 : index
    %c0_12 = arith.constant 0 : index
    %13 = vector.load %arg6[%c0_11, %c0_12] : memref<8x128xf32, #tpu.memory_space<vmem>>, vector<8x128xf32>
    tpu.vector_store %arg6[%c0_11, %c0_12], %12 {strides = array<i32>} : memref<8x128xf32, #tpu.memory_space<vmem>>, vector<8x128xf32>,
    return
  }
  func.func @transform_0(%arg0: i32) -> (i32, i32) {
    %c0_i32 = arith.constant 0 : i32
    %c0_i32_0 = arith.constant 0 : i32
    return %arg0, %c0_i32 : i32, i32
  }
  func.func @transform_1(%arg0: i32) -> (i32, i32) {
    %c0_i32 = arith.constant 0 : i32
    %c0_i32_0 = arith.constant 0 : i32
    %c0_i32_1 = arith.constant 0 : i32
    return %c0_i32, %c0_i32_0 : i32, i32
  }
  func.func @transform_2(%arg0: i32) -> (i32, i32) {
    %c0_i32 = arith.constant 0 : i32
    %c0_i32_0 = arith.constant 0 : i32
    %c0_i32_1 = arith.constant 0 : i32
    return %c0_i32, %c0_i32_0 : i32, i32
  }
  func.func @transform_3(%arg0: i32) -> (i32, i32) {
    %c0_i32 = arith.constant 0 : i32
    %c0_i32_0 = arith.constant 0 : i32
    %c0_i32_1 = arith.constant 0 : i32
    return %c0_i32, %c0_i32_0 : i32, i32
  }
  func.func @transform_4(%arg0: i32) -> (i32, i32) {
    %c0_i32 = arith.constant 0 : i32
    %c0_i32_0 = arith.constant 0 : i32
    %c0_i32_1 = arith.constant 0 : i32
    return %c0_i32, %c0_i32_0 : i32, i32
  }
  func.func @transform_5(%arg0: i32) -> (i32, i32) {
    %c0_i32 = arith.constant 0 : i32
    %c0_i32_0 = arith.constant 0 : i32
    return %arg0, %c0_i32 : i32, i32
  }
}

</mosaic_0001>

<llo_original>
// kernel: tpu_custom_call.1
$region0: #{tpu_custom_call.1}
  #allocation0 [shape = 'u32[]', space=smem, size = 0x4, offset = 0x4, fixed_abs, tag = 'smem constant byte address 0x4 - core index']
  #allocation1 [shape = 'u32[144,128]{1,0:T(1,128)}', space=vmem, size = 0x12000, scoped, tag = 'internal scratch']
  %s0 = inlined_call_operand.hbm [shape: f32[8,32], index: 0, kind: input, shape index: {}]
  %s1 = inlined_call_operand.hbm [shape: f32[32,64], index: 1, kind: input, shape index: {}]
  %s2 = inlined_call_operand.vmem [shape: f32[1,64], index: 2, kind: input, shape index: {}]
  %s3 = inlined_call_operand.hbm [shape: f32[64,128], index: 3, kind: input, shape index: {}]
  %s4 = inlined_call_operand.vmem [shape: f32[1,128], index: 4, kind: input, shape index: {}]
  %s5 = inlined_call_operand.hbm [shape: f32[8,128], index: 5, kind: output, shape index: {}]
  %s6 = sld [smem:[#allocation0]]
  $region42: #{tpu_custom_call.1} parent=0
    _
  %s8 = ssub.s32 1, %s6
  %s9 = scalar_select 0, %s8, %s6
  $region1: #{tpu_custom_call.1} parent=0
    #allocation2 [shape = 'u8[4096]{0}', space=vmem, size = 0x1000, scoped, tag = 'input window, operand 0, single buffered']
    #allocation3 [shape = 's32[1]{0}', space=sflag, size = 0x4, scoped, tag = 'scoped memory for tpu_custom_call.1']
    #allocation4 [shape = 's32[1]{0}', space=sflag, size = 0x4, scoped, tag = 'scoped memory for tpu_custom_call.1']
    #allocation5 [shape = 'u8[16384]{0}', space=vmem, size = 0x4000, scoped, tag = 'input window, operand 1, single buffered']
    #allocation6 [shape = 's32[1]{0}', space=sflag, size = 0x4, scoped, tag = 'scoped memory for tpu_custom_call.1']
    #allocation7 [shape = 'u8[32768]{0}', space=vmem, size = 0x8000, scoped, tag = 'input window, operand 3, single buffered']
    #allocation8 [shape = 'u8[4096]{0}', space=vmem, size = 0x1000, scoped, tag = 'output window, operand 0, single buffered']
    %10 = vsyncpa [#allocation3], 0
    %11 = vsyncpa [#allocation6], 0
    %12 = vsyncpa [#allocation4], 0
    // Predicated region
    $region2: #{tpu_custom_call.1} parent=1 // pred_check
      _
    $region3: #{tpu_custom_call.1} parent=1 // pred_check_branch
      %14 = sbr.rel (0) target = $region5
    $region4: #{tpu_custom_call.1} parent=1 // pred_region
      %s16 = ssub.s32 128, 128
      %17 = vsyncadd [#allocation3], %s16
      %s19 = sshll.u32 [#allocation2], 4
      %s20 = int_to_ptr.vmem [resolvable:$true] %s19
      %22 = dma.hbm_to_vmem [thread:$0]  %s0, 128, %s20, [#allocation3]
    $region5: #{tpu_custom_call.1} parent=1 // pred_fallthru
      _
    // Predicated region
    $region6: #{tpu_custom_call.1} parent=1 // pred_check
      _
    $region7: #{tpu_custom_call.1} parent=1 // pred_check_branch
      %24 = sbr.rel (0) target = $region9
    $region8: #{tpu_custom_call.1} parent=1 // pred_region
      %s26 = ssub.s32 512, 512
      %27 = vsyncadd [#allocation6], %s26
      %s28 = sshll.u32 [#allocation5], 4
      %s29 = int_to_ptr.vmem [resolvable:$true] %s28
      %34 = dma.hbm_to_vmem [thread:$0]  %s1, 512, %s29, [#allocation6], 128, 128, 8
    $region9: #{tpu_custom_call.1} parent=1 // pred_fallthru
      _
    // Predicated region
    $region10: #{tpu_custom_call.1} parent=1 // pred_check
      _
    $region11: #{tpu_custom_call.1} parent=1 // pred_check_branch
      %36 = sbr.rel (0) target = $region13
    $region12: #{tpu_custom_call.1} parent=1 // pred_region
      _
    $region13: #{tpu_custom_call.1} parent=1 // pred_fallthru
      _
    // Predicated region
    $region14: #{tpu_custom_call.1} parent=1 // pred_check
      _
    $region15: #{tpu_custom_call.1} parent=1 // pred_check_branch
      %38 = sbr.rel (0) target = $region17
    $region16: #{tpu_custom_call.1} parent=1 // pred_region
      %s40 = ssub.s32 1024, 1024
      %41 = vsyncadd [#allocation6], %s40
      %s42 = sshll.u32 [#allocation7], 4
      %s43 = int_to_ptr.vmem [resolvable:$true] %s42
      %48 = dma.hbm_to_vmem [thread:$0]  %s3, 1024, %s43, [#allocation6], 128, 128, 8
    $region17: #{tpu_custom_call.1} parent=1 // pred_fallthru
      _
    // Predicated region
    $region18: #{tpu_custom_call.1} parent=1 // pred_check
      _
    $region19: #{tpu_custom_call.1} parent=1 // pred_check_branch
      %50 = sbr.rel (0) target = $region21
    $region20: #{tpu_custom_call.1} parent=1 // pred_region
      _
    $region21: #{tpu_custom_call.1} parent=1 // pred_fallthru
      _
    // Predicated region
    $region22: #{tpu_custom_call.1} parent=1 // pred_check
      _
    $region23: #{tpu_custom_call.1} parent=1 // pred_check_branch
      %52 = sbr.rel (0) target = $region25
    $region24: #{tpu_custom_call.1} parent=1 // pred_region
      %53 = dma.done [#allocation3], 128
    $region25: #{tpu_custom_call.1} parent=1 // pred_fallthru
      _
    // Predicated region
    $region26: #{tpu_custom_call.1} parent=1 // pred_check
      _
    $region27: #{tpu_custom_call.1} parent=1 // pred_check_branch
      %55 = sbr.rel (0) target = $region29
    $region28: #{tpu_custom_call.1} parent=1 // pred_region
      %56 = dma.done [#allocation6], 512
    $region29: #{tpu_custom_call.1} parent=1 // pred_fallthru
      _
    // Predicated region
    $region30: #{tpu_custom_call.1} parent=1 // pred_check
      _
    $region31: #{tpu_custom_call.1} parent=1 // pred_check_branch
      %58 = sbr.rel (0) target = $region33
    $region32: #{tpu_custom_call.1} parent=1 // pred_region
      %59 = dma.done [#allocation6], 1024
    $region33: #{tpu_custom_call.1} parent=1 // pred_fallthru
      _
    %v60 = vld [vmem:[#allocation2] sm:$0xff]
    %v61 = vld [vmem:[#allocation5] sm:$0xff]
    %v62 = vld [vmem:[#allocation5 + $0x8] sm:$0xff]
    %v63 = vld [vmem:[#allocation5 + $0x10] sm:$0xff]
    %v64 = vld [vmem:[#allocation5 + $0x18] sm:$0xff]
    %v65 = vld [vmem:[%s2] sm:$0x1]
    %v67 = vlaneseq
    %v68 = vshrl.u32 %v67, 7
    %v69 = vsub.s32 0, %v68
    %v70 = vrot.slane %v65, %v69
    %vm72 = vcmask 261120
    %v74 = vsel %vm72, %v60, 0
    %76 = vmatprep.subr.mxu0 0.0
    %77 = vmatpush1.msra.mxu0 %v61
    %78 = vmatprep.subr.mxu0 0.0
    %79 = vmatpush1.msra.mxu0 %v62
    %80 = vmatprep.subr.mxu0 0.0
    %81 = vmatpush1.msra.mxu0 %v63
    %82 = vmatprep.subr.mxu0 0.0
    %83 = vmatpush1.msra.mxu0 %v64
    %84 = vmatprep.subr.mxu0 0.0
    %85 = vmatpush1.msra.mxu0 0.0
    %86 = vmatprep.subr.mxu0 0.0
    %87 = vmatpush1.msra.mxu0 0.0
    %88 = vmatprep.subr.mxu0 0.0
    %89 = vmatpush1.msra.mxu0 0.0
    %90 = vmatprep.subr.mxu0 0.0
    %91 = vmatpush1.msra.mxu0 0.0
    %92 = vmatprep.subr.mxu0 0.0
    %93 = vmatpush1.msra.mxu0 0.0
    %94 = vmatprep.subr.mxu0 0.0
    %95 = vmatpush1.msra.mxu0 0.0
    %96 = vmatprep.subr.mxu0 0.0
    %97 = vmatpush1.msra.mxu0 0.0
    %98 = vmatprep.subr.mxu0 0.0
    %99 = vmatpush1.msra.mxu0 0.0
    %100 = vmatprep.subr.mxu0 0.0
    %101 = vmatpush1.msra.mxu0 0.0
    %102 = vmatprep.subr.mxu0 0.0
    %103 = vmatpush1.msra.mxu0 0.0
    %104 = vmatprep.subr.mxu0 0.0
    %105 = vmatpush1.msra.mxu0 0.0
    %106 = vmatprep.subr.mxu0 0.0
    %107 = vmatpush1.msra.mxu0 0.0
    %108 = vmatprep.subr.mxu0 0.0
    %109 = vmatpush1.msra.mxu0 0.0
    %110 = vmatprep.subr.mxu0 0.0
    %111 = vmatpush1.msra.mxu0 0.0
    %112 = vmatprep.subr.mxu0 0.0
    %113 = vmatpush1.msra.mxu0 0.0
    %114 = vmatprep.subr.mxu0 0.0
    %115 = vmatpush1.msra.mxu0 0.0
    %116 = vmatprep.subr.mxu0 0.0
    %117 = vmatpush1.msra.mxu0 0.0
    %118 = vmatprep.subr.mxu0 0.0
    %119 = vmatpush1.msra.mxu0 0.0
    %120 = vmatprep.subr.mxu0 0.0
    %121 = vmatpush1.msra.mxu0 0.0
    %122 = vmatprep.subr.mxu0 0.0
    %123 = vmatpush1.msra.mxu0 0.0
    %124 = vmatprep.subr.mxu0 0.0
    %125 = vmatpush1.msra.mxu0 0.0
    %126 = vmatprep.subr.mxu0 0.0
    %127 = vmatpush1.msra.mxu0 0.0
    %128 = vmatprep.subr.mxu0 0.0
    %129 = vmatpush1.msra.mxu0 0.0
    %130 = vmatprep.subr.mxu0 0.0
    %131 = vmatpush1.msra.mxu0 0.0
    %132 = vmatprep.subr.mxu0 0.0
    %133 = vmatpush1.msra.mxu0 0.0
    %134 = vmatprep.subr.mxu0 0.0
    %135 = vmatpush1.msra.mxu0 0.0
    %136 = vmatprep.subr.mxu0 0.0
    %137 = vmatpush1.msra.mxu0 0.0
    %138 = vmatprep.subr.mxu0 0.0
    %139 = vmatpush1.msra.mxu0 0.0
    %140 = vmatprep.mubr.f32.mxu0 0.0
    %141 = vmatmul.mubr.f32.gmra.mrb[0].mxu0 %v74
    %v142 = vpop.f32.mrb[0].mxu0
    %v143 = vadd.f32 %v70, %v142
    %v144 = vpop.f32.mrb[0].mxu0
    %145 = vdwg.mxu0
    %v146 = vmax.f32 %v143, 0.0
    %v147 = vld [vmem:[#allocation7] sm:$0xff]
    %v148 = vld [vmem:[#allocation7 + $0x8] sm:$0xff]
    %v149 = vld [vmem:[#allocation7 + $0x10] sm:$0xff]
    %v150 = vld [vmem:[#allocation7 + $0x18] sm:$0xff]
    %v151 = vld [vmem:[#allocation7 + $0x20] sm:$0xff]
    %v152 = vld [vmem:[#allocation7 + $0x28] sm:$0xff]
    %v153 = vld [vmem:[#allocation7 + $0x30] sm:$0xff]
    %v154 = vld [vmem:[#allocation7 + $0x38] sm:$0xff]
    %v155 = vld [vmem:[%s4] sm:$0x1]
    %v157 = vlaneseq
    %v158 = vshrl.u32 %v157, 7
    %v159 = vsub.s32 0, %v158
    %v160 = vrot.slane %v155, %v159
    %vm162 = vcmask 523264
    %v164 = vsel %vm162, %v146, 0
    %166 = vmatprep.subr.mxu0 0.0
    %167 = vmatpush1.msra.mxu0 %v147
    %168 = vmatprep.subr.mxu0 0.0
    %169 = vmatpush1.msra.mxu0 %v148
    %170 = vmatprep.subr.mxu0 0.0
    %171 = vmatpush1.msra.mxu0 %v149
    %172 = vmatprep.subr.mxu0 0.0
    %173 = vmatpush1.msra.mxu0 %v150
    %174 = vmatprep.subr.mxu0 0.0
    %175 = vmatpush1.msra.mxu0 %v151
    %176 = vmatprep.subr.mxu0 0.0
    %177 = vmatpush1.msra.mxu0 %v152
    %178 = vmatprep.subr.mxu0 0.0
    %179 = vmatpush1.msra.mxu0 %v153
    %180 = vmatprep.subr.mxu0 0.0
    %181 = vmatpush1.msra.mxu0 %v154
    %182 = vmatprep.subr.mxu0 0.0
    %183 = vmatpush1.msra.mxu0 0.0
    %184 = vmatprep.subr.mxu0 0.0
    %185 = vmatpush1.msra.mxu0 0.0
    %186 = vmatprep.subr.mxu0 0.0
    %187 = vmatpush1.msra.mxu0 0.0
    %188 = vmatprep.subr.mxu0 0.0
    %189 = vmatpush1.msra.mxu0 0.0
    %190 = vmatprep.subr.mxu0 0.0
    %191 = vmatpush1.msra.mxu0 0.0
    %192 = vmatprep.subr.mxu0 0.0
    %193 = vmatpush1.msra.mxu0 0.0
    %194 = vmatprep.subr.mxu0 0.0
    %195 = vmatpush1.msra.mxu0 0.0
    %196 = vmatprep.subr.mxu0 0.0
    %197 = vmatpush1.msra.mxu0 0.0
    %198 = vmatprep.subr.mxu0 0.0
    %199 = vmatpush1.msra.mxu0 0.0
    %200 = vmatprep.subr.mxu0 0.0
    %201 = vmatpush1.msra.mxu0 0.0
    %202 = vmatprep.subr.mxu0 0.0
    %203 = vmatpush1.msra.mxu0 0.0
    %204 = vmatprep.subr.mxu0 0.0
    %205 = vmatpush1.msra.mxu0 0.0
    %206 = vmatprep.subr.mxu0 0.0
    %207 = vmatpush1.msra.mxu0 0.0
    %208 = vmatprep.subr.mxu0 0.0
    %209 = vmatpush1.msra.mxu0 0.0
    %210 = vmatprep.subr.mxu0 0.0
    %211 = vmatpush1.msra.mxu0 0.0
    %212 = vmatprep.subr.mxu0 0.0
    %213 = vmatpush1.msra.mxu0 0.0
    %214 = vmatprep.subr.mxu0 0.0
    %215 = vmatpush1.msra.mxu0 0.0
    %216 = vmatprep.subr.mxu0 0.0
    %217 = vmatpush1.msra.mxu0 0.0
    %218 = vmatprep.subr.mxu0 0.0
    %219 = vmatpush1.msra.mxu0 0.0
    %220 = vmatprep.subr.mxu0 0.0
    %221 = vmatpush1.msra.mxu0 0.0
    %222 = vmatprep.subr.mxu0 0.0
    %223 = vmatpush1.msra.mxu0 0.0
    %224 = vmatprep.subr.mxu0 0.0
    %225 = vmatpush1.msra.mxu0 0.0
    %226 = vmatprep.subr.mxu0 0.0
    %227 = vmatpush1.msra.mxu0 0.0
    %228 = vmatprep.subr.mxu0 0.0
    %229 = vmatpush1.msra.mxu0 0.0
    %230 = vmatprep.mubr.f32.mxu0 0.0
    %231 = vmatmul.mubr.f32.gmra.mrb[0].mxu0 %v164
    %v232 = vpop.f32.mrb[0].mxu0
    %v233 = vadd.f32 %v160, %v232
    %v234 = vpop.f32.mrb[0].mxu0
    %235 = vdwg.mxu0
    %236 = vst [vmem:[#allocation8] sm:$0xff] %v233
    // Predicated region
    $region34: #{tpu_custom_call.1} parent=1 // pred_check
      _
    $region35: #{tpu_custom_call.1} parent=1 // pred_check_branch
      %238 = sbr.rel (0) target = $region37
    $region36: #{tpu_custom_call.1} parent=1 // pred_region
      %s240 = ssub.s32 128, 128
      %241 = vsyncadd [#allocation4], %s240
      %s243 = sshll.u32 [#allocation8], 4
      %s244 = int_to_ptr.vmem [resolvable:$true] %s243
      %246 = dma.vmem_to_hbm [thread:$0]  %s244, 128, %s5, [#allocation4]
    $region37: #{tpu_custom_call.1} parent=1 // pred_fallthru
      _
    // Predicated region
    $region38: #{tpu_custom_call.1} parent=1 // pred_check
      _
    $region39: #{tpu_custom_call.1} parent=1 // pred_check_branch
      %248 = sbr.rel (0) target = $region41
    $region40: #{tpu_custom_call.1} parent=1 // pred_region
      %249 = dma.done [#allocation4], 128
    $region41: #{tpu_custom_call.1} parent=1 // pred_fallthru
      _
    %250 = vsyncpa [#allocation3], 1
    %251 = vsyncpa [#allocation6], 1
    %252 = vsyncpa [#allocation4], 1

</llo_original>
